<compile_context>
chip_gen: v7x
topology: tpu7x:2x2x1
jax: 0.10.0
libtpu: 0.0.40
codegen_flags: <defaults>
</compile_context>

<pallas_src>
import jax
import jax.numpy as jnp
from jax import lax
from jax.experimental import pallas as pl
from jax.experimental.pallas import tpu as pltpu

# SELU constants (match torch.nn.functional.selu / jax.nn.selu)
_ALPHA = 1.6732632423543772848170429916717
_SCALE = 1.0507009873554804934193349852946
_SA = _SCALE * _ALPHA  # folded constant for the negative branch

_LANE = 128
_SUBLANE = 8
_TM_MAX = 4096  # rows per plane-block: 4096*128*4 B = 2 MiB per VMEM buffer


def complex_selu_kernel(re_ref, im_ref, ore_ref, oim_ref):
    """Elementwise SELU applied to the real and imaginary planes of one tile."""

    def _selu(x):
        # exp only ever sees values <= 0 -> no inf generated on the dead branch.
        e = jnp.exp(jnp.minimum(x, 0.0))          # EUP slot (free vs. VPU)
        return jnp.where(x > 0.0, _SCALE * x, _SA * e - _SA)

    ore_ref[...] = _selu(re_ref[...])
    oim_ref[...] = _selu(im_ref[...])


def complex_selu(x):
    """Apply ComplexSELU to a complex-valued array of any shape (e.g. NCHW)."""
    if not jnp.issubdtype(x.dtype, jnp.complexfloating):
        raise TypeError("complex_selu expects a complex-valued input")
    if x.dtype != jnp.complex64:
        # complex128 would be silently downcast otherwise; keep complex64 path.
        x = x.astype(jnp.complex64)

    orig_shape = x.shape
    n = x.size  # elements per plane

    # Planar extraction (XLA cannot bitcast complex<->real, so this pass and
    # the final lax.complex merge are the minimal unavoidable glue).
    re = jnp.real(x)
    im = jnp.imag(x)

    # Only pad the sub-128 tail required for the lane-dense (rows, 128) view.
    pad = (-n) % _LANE

    def to2d(p):
        p = p.reshape(-1)
        if pad:
            p = jnp.pad(p, (0, pad))
        return p.reshape(-1, _LANE)

    re2d = to2d(re)
    im2d = to2d(im)
    rows = re2d.shape[0]

    # Tile selection: biggest block up to _TM_MAX rows, but aim for at least
    # two grid steps so v7x's two TensorCores both get work; rows multiple of 8.
    half = -(-rows // 2)
    half = -(-half // _SUBLANE) * _SUBLANE
    tm = int(min(_TM_MAX, max(_SUBLANE, half)))
    grid = (pl.cdiv(rows, tm),)  # partial last block is clipped by Pallas

    spec = pl.BlockSpec((tm, _LANE), lambda i: (i, 0))

    elems = 2 * n
    cost = pl.CostEstimate(
        flops=6 * elems,            # min, cmp, 2 muls, sub, select per element
        transcendentals=elems,      # one exp per element
        bytes_accessed=2 * 4 * elems,
    )

    out_re2d, out_im2d = pl.pallas_call(
        complex_selu_kernel,
        out_shape=(
            jax.ShapeDtypeStruct((rows, _LANE), jnp.float32),
            jax.ShapeDtypeStruct((rows, _LANE), jnp.float32),
        ),
        grid=grid,
        in_specs=[spec, spec],
        out_specs=(spec, spec),
        input_output_aliases={0: 0, 1: 1},
        compiler_params=pltpu.CompilerParams(
            dimension_semantics=("parallel",),
            vmem_limit_bytes=32 * 1024 * 1024,
        ),
        cost_estimate=cost,
    )(re2d, im2d)

    def from2d(p2d):
        p = p2d.reshape(-1)
        if pad:
            p = p[:n]
        return p.reshape(orig_shape)

    return lax.complex(from2d(out_re2d), from2d(out_im2d))


def _reference(x):
    """Pure-JAX reference mirroring the PyTorch forward."""
    return lax.complex(jax.nn.selu(jnp.real(x)), jax.nn.selu(jnp.imag(x)))


if __name__ == "__main__":
    key = jax.random.PRNGKey(0)
    k_re, k_im = jax.random.split(key)
    shape = (2, 4, 16, 16)  # NCHW, complex-valued input
    x_re = jax.random.normal(k_re, shape, dtype=jnp.float32)
    x_im = jax.random.normal(k_im, shape, dtype=jnp.float32)
    x = lax.complex(x_re, x_im)

    # `inplace=True` has no meaning in functional JAX; forward result is identical.
    fn = jax.jit(complex_selu)
    out = jax.block_until_ready(fn(x))

    ref = _reference(x)
    assert out.shape == shape and out.dtype == jnp.complex64
    assert jnp.allclose(out, ref, atol=1e-5, rtol=1e-5)

    print("KERNEL_OK")
</pallas_src>

<mosaic_0001>
module attributes {stable_mosaic.version = 11 : i64} {
  func.func @complex_selu_kernel(%arg0: i32, %arg1: memref<8x128xf32, #tpu.memory_space<vmem>>, %arg2: memref<8x128xf32, #tpu.memory_space<vmem>>, %arg3: memref<8x128xf32, #tpu.memory_space<vmem>>, %arg4: memref<8x128xf32, #tpu.memory_space<vmem>>) attributes {dimension_semantics = [#tpu.dimension_semantics<parallel>], iteration_bounds = array<i64: 2>, scalar_prefetch = 0 : i64, scratch_operands = 0 : i64, tpu.core_type = #tpu.core_type<tc>, window_params = [{transform_indices = @transform_0, window_bounds = array<i64: 8, 128>}, {transform_indices = @transform_1, window_bounds = array<i64: 8, 128>}, {transform_indices = @transform_2, window_bounds = array<i64: 8, 128>}, {transform_indices = @transform_3, window_bounds = array<i64: 8, 128>}]} {
    %c0 = arith.constant 0 : index
    %c0_0 = arith.constant 0 : index
    %0 = vector.load %arg1[%c0, %c0_0] : memref<8x128xf32, #tpu.memory_space<vmem>>, vector<8x128xf32>
    %cst = arith.constant 0.000000e+00 : f32
    %1 = vector.broadcast %cst : f32 to vector<8x128xf32>
    %2 = arith.minimumf %0, %1 : vector<8x128xf32>
    %3 = math.exp %2 : vector<8x128xf32>
    %cst_1 = arith.constant 0.000000e+00 : f32
    %4 = vector.broadcast %cst_1 : f32 to vector<8x128xf32>
    %5 = arith.cmpf ogt, %0, %4 : vector<8x128xf32>
    %cst_2 = arith.constant 1.05070102 : f32
    %6 = vector.broadcast %cst_2 : f32 to vector<8x128xf32>
    %7 = arith.mulf %6, %0 : vector<8x128xf32>
    %cst_3 = arith.constant 1.75809932 : f32
    %8 = vector.broadcast %cst_3 : f32 to vector<8x128xf32>
    %9 = arith.mulf %8, %3 : vector<8x128xf32>
    %cst_4 = arith.constant 1.75809932 : f32
    %10 = vector.broadcast %cst_4 : f32 to vector<8x128xf32>
    %11 = arith.subf %9, %10 : vector<8x128xf32>
    %12 = arith.select %5, %7, %11 : vector<8x128xi1>, vector<8x128xf32>
    %c0_5 = arith.constant 0 : index
    %c0_6 = arith.constant 0 : index
    %13 = vector.load %arg3[%c0_5, %c0_6] : memref<8x128xf32, #tpu.memory_space<vmem>>, vector<8x128xf32>
    tpu.vector_store %arg3[%c0_5, %c0_6], %12 {strides = array<i32>} : memref<8x128xf32, #tpu.memory_space<vmem>>, vector<8x128xf32>,
    %c0_7 = arith.constant 0 : index
    %c0_8 = arith.constant 0 : index
    %14 = vector.load %arg2[%c0_7, %c0_8] : memref<8x128xf32, #tpu.memory_space<vmem>>, vector<8x128xf32>
    %cst_9 = arith.constant 0.000000e+00 : f32
    %15 = vector.broadcast %cst_9 : f32 to vector<8x128xf32>
    %16 = arith.minimumf %14, %15 : vector<8x128xf32>
    %17 = math.exp %16 : vector<8x128xf32>
    %cst_10 = arith.constant 0.000000e+00 : f32
    %18 = vector.broadcast %cst_10 : f32 to vector<8x128xf32>
    %19 = arith.cmpf ogt, %14, %18 : vector<8x128xf32>
    %cst_11 = arith.constant 1.05070102 : f32
    %20 = vector.broadcast %cst_11 : f32 to vector<8x128xf32>
    %21 = arith.mulf %20, %14 : vector<8x128xf32>
    %cst_12 = arith.constant 1.75809932 : f32
    %22 = vector.broadcast %cst_12 : f32 to vector<8x128xf32>
    %23 = arith.mulf %22, %17 : vector<8x128xf32>
    %cst_13 = arith.constant 1.75809932 : f32
    %24 = vector.broadcast %cst_13 : f32 to vector<8x128xf32>
    %25 = arith.subf %23, %24 : vector<8x128xf32>
    %26 = arith.select %19, %21, %25 : vector<8x128xi1>, vector<8x128xf32>
    %c0_14 = arith.constant 0 : index
    %c0_15 = arith.constant 0 : index
    %27 = vector.load %arg4[%c0_14, %c0_15] : memref<8x128xf32, #tpu.memory_space<vmem>>, vector<8x128xf32>
    tpu.vector_store %arg4[%c0_14, %c0_15], %26 {strides = array<i32>} : memref<8x128xf32, #tpu.memory_space<vmem>>, vector<8x128xf32>,
    return
  }
  func.func @transform_0(%arg0: i32) -> (i32, i32) {
    %c0_i32 = arith.constant 0 : i32
    %c0_i32_0 = arith.constant 0 : i32
    return %arg0, %c0_i32 : i32, i32
  }
  func.func @transform_1(%arg0: i32) -> (i32, i32) {
    %c0_i32 = arith.constant 0 : i32
    %c0_i32_0 = arith.constant 0 : i32
    return %arg0, %c0_i32 : i32, i32
  }
  func.func @transform_2(%arg0: i32) -> (i32, i32) {
    %c0_i32 = arith.constant 0 : i32
    %c0_i32_0 = arith.constant 0 : i32
    return %arg0, %c0_i32 : i32, i32
  }
  func.func @transform_3(%arg0: i32) -> (i32, i32) {
    %c0_i32 = arith.constant 0 : i32
    %c0_i32_0 = arith.constant 0 : i32
    return %arg0, %c0_i32 : i32, i32
  }
}

</mosaic_0001>

<llo_original>
// kernel: custom-call
$region0: #{custom-call}
  %s0 = inlined_call_operand.hbm [shape: c64[2,4,16,16], index: 0, kind: input, shape index: {}]
  %s1 = inlined_call_operand.vmem [shape: f32[2,4,16,16], index: 1, kind: output, shape index: {}]
  $region1: #{custom-call} parent=0
    #allocation0 [shape = 's32[1]{0}', space=sflag, size = 0x4, scoped, tag = 'scoped memory for custom-call']
    %2 = vsyncpa [#allocation0], 0
    %s3 = sshll.u32 %s1, 4
    %s4 = int_to_ptr.vmem [resolvable:$true] %s3
    %6 = dma.hbm_to_vmem [thread:$0]  %s0, 2048, %s4, [#allocation0]
    %7 = dma.done [#allocation0], 2048
    %8 = vsyncpa [#allocation0], 1

// kernel: custom-call.1
$region0: #{custom-call.1}
  %s0 = inlined_call_operand.hbm [shape: c64[2,4,16,16], index: 0, kind: input, shape index: {}]
  %s1 = inlined_call_operand.vmem [shape: f32[2,4,16,16], index: 1, kind: output, shape index: {}]
  %s2 = scalar_lea.hbm %s0, 2048
  $region1: #{custom-call.1} parent=0
    #allocation0 [shape = 's32[1]{0}', space=sflag, size = 0x4, scoped, tag = 'scoped memory for custom-call.1']
    %3 = vsyncpa [#allocation0], 0
    %s4 = sshll.u32 %s1, 4
    %s5 = int_to_ptr.vmem [resolvable:$true] %s4
    %7 = dma.hbm_to_vmem [thread:$0]  %s2, 2048, %s5, [#allocation0]
    %8 = dma.done [#allocation0], 2048
    %9 = vsyncpa [#allocation0], 1

// kernel: custom-call.2
$region0: #{custom-call.2}
  %s0 = inlined_call_operand.vmem [shape: f32[2,4,16,16], index: 0, kind: input, shape index: {}]
  %s1 = inlined_call_operand.vmem [shape: f32[2,4,16,16], index: 1, kind: input, shape index: {}]
  %s2 = inlined_call_operand.hbm [shape: c64[2,4,16,16], index: 2, kind: output, shape index: {}]
  %s3 = scalar_lea.hbm %s2, 2048
  $region1: #{custom-call.2} parent=0
    #allocation0 [shape = 's32[1]{0}', space=sflag, size = 0x4, scoped, tag = 'scoped memory for custom-call.2']
    %4 = vsyncpa [#allocation0], 0
    %s5 = sshll.u32 %s0, 4
    %s6 = int_to_ptr.vmem [resolvable:$true] %s5
    %8 = dma.vmem_to_hbm [thread:$0]  %s6, 2048, %s2, [#allocation0]
    %9 = dma.done [#allocation0], 2048
    %10 = vsyncpa [#allocation0], 1
  $region2: #{custom-call.2} parent=0
    #allocation1 [shape = 's32[1]{0}', space=sflag, size = 0x4, scoped, tag = 'scoped memory for custom-call.2']
    %11 = vsyncpa [#allocation1], 0
    %s12 = sshll.u32 %s1, 4
    %s13 = int_to_ptr.vmem [resolvable:$true] %s12
    %15 = dma.vmem_to_hbm [thread:$0]  %s13, 2048, %s3, [#allocation1]
    %16 = dma.done [#allocation1], 2048
    %17 = vsyncpa [#allocation1], 1

// kernel: complex_selu.1
$region0: #{complex_selu.1}
  #allocation0 [shape = 'u32[]', space=smem, size = 0x4, offset = 0x4, fixed_abs, tag = 'smem constant byte address 0x4 - core index']
  #allocation1 [shape = 'u32[144,128]{1,0:T(1,128)}', space=vmem, size = 0x12000, scoped, tag = 'internal scratch']
  %s0 = inlined_call_operand.vmem [shape: f32[16,128], index: 0, kind: input, shape index: {}, may-alias: {0,2}]
  %s1 = inlined_call_operand.vmem [shape: f32[16,128], index: 1, kind: input, shape index: {}, may-alias: {1,3}]
  %s2 = inlined_call_operand.vmem [shape: f32[16,128], index: 2, kind: output, shape index: {0}, may-alias: {0,2}]
  %s3 = inlined_call_operand.vmem [shape: f32[16,128], index: 3, kind: output, shape index: {1}, may-alias: {1,3}]
  %4 = xla_tuple %s2, %s3
  %s5 = sld [smem:[#allocation0]]
  $region49: #{complex_selu.1} parent=0
    _
  %s7 = ssub.s32 1, %s5
  %s8 = scalar_select 0, %s7, %s5
  loop: start=0, step=1, limit=4
  $region2: #{complex_selu.1} parent=0 // loop_pre_header
    _
  $region3: #{complex_selu.1} parent=0 // loop_header
    %s10 = sphi 0, %s14
    %p11 = scmp.ge.s32.totalorder %s10, 4
    %s20 = sphi 0, %s22
    %s23 = sphi 0, %s20
    %s24 = sphi 0, %s23
    %s40 = sphi 0, %s24
    %s46 = sphi 0, %s48
    %s49 = sphi 0, %s46
    %s50 = sphi 0, %s49
    %s66 = sphi 0, %s50
    %s72 = sphi 0, %s74
    %s75 = sphi 0, %s72
    %s76 = sphi 0, %s75
    %s92 = sphi 0, %s76
    %s98 = sphi 0, %s100
    %s101 = sphi 0, %s98
    %s102 = sphi 0, %s101
    %s118 = sphi 0, %s102
  $region4: #{complex_selu.1} parent=0 // loop_header_branch
    %13 = sbr.rel (%p11) target = $region8
  $region5: #{complex_selu.1} parent=0 // loop_body
    %s15 = ssub.s32 %s10, 1
    %s16 = ssub.s32 %s10, 2
    %s17 = sadd.s32 %s10, 1
    %s18 = ssub.s32 %s10, %s17
    %p19 = scmp.eq.s32.totalorder %s18, 0
    %s21 = sadd.s32 %s20, 1
    %s22 = scalar_select %p19, %s20, %s21
    %p25 = pneg %p19
    %p26 = scmp.eq.s32.totalorder %s10, 1
    %p27 = por %p25, %p26
    %p28 = scmp.ne.s32.totalorder %s20, %s23
    %p29 = scmp.eq.s32.totalorder %s10, 0
    %p30 = por %p28, %p29
    %p31 = scmp.ne.s32.totalorder %s20, %s23
    %p32 = scmp.eq.s32.totalorder %s15, 1
    %p33 = por %p31, %p32
    %p34 = scmp.ne.s32.totalorder %s23, %s24
    %p35 = scmp.eq.s32.totalorder %s15, 0
    %p36 = por %p34, %p35
    %p37 = scmp.ne.s32.totalorder %s23, %s24
    %p38 = scmp.eq.s32.totalorder %s16, 1
    %p39 = por %p37, %p38
    %p41 = scmp.ne.s32.totalorder %s24, %s40
    %p42 = scmp.eq.s32.totalorder %s16, 0
    %p43 = por %p41, %p42
    %s44 = ssub.s32 %s10, %s17
    %p45 = scmp.eq.s32.totalorder %s44, 0
    %s47 = sadd.s32 %s46, 1
    %s48 = scalar_select %p45, %s46, %s47
    %p51 = pneg %p45
    %p52 = scmp.eq.s32.totalorder %s10, 1
    %p53 = por %p51, %p52
    %p54 = scmp.ne.s32.totalorder %s46, %s49
    %p55 = scmp.eq.s32.totalorder %s10, 0
    %p56 = por %p54, %p55
    %p57 = scmp.ne.s32.totalorder %s46, %s49
    %p58 = scmp.eq.s32.totalorder %s15, 1
    %p59 = por %p57, %p58
    %p60 = scmp.ne.s32.totalorder %s49, %s50
    %p61 = scmp.eq.s32.totalorder %s15, 0
    %p62 = por %p60, %p61
    %p63 = scmp.ne.s32.totalorder %s49, %s50
    %p64 = scmp.eq.s32.totalorder %s16, 1
    %p65 = por %p63, %p64
    %p67 = scmp.ne.s32.totalorder %s50, %s66
    %p68 = scmp.eq.s32.totalorder %s16, 0
    %p69 = por %p67, %p68
    %s70 = ssub.s32 %s10, %s17
    %p71 = scmp.eq.s32.totalorder %s70, 0
    %s73 = sadd.s32 %s72, 1
    %s74 = scalar_select %p71, %s72, %s73
    %p77 = pneg %p71
    %p78 = scmp.eq.s32.totalorder %s10, 1
    %p79 = por %p77, %p78
    %p80 = scmp.ne.s32.totalorder %s72, %s75
    %p81 = scmp.eq.s32.totalorder %s10, 0
    %p82 = por %p80, %p81
    %p83 = scmp.ne.s32.totalorder %s72, %s75
    %p84 = scmp.eq.s32.totalorder %s15, 1
    %p85 = por %p83, %p84
    %p86 = scmp.ne.s32.totalorder %s75, %s76
    %p87 = scmp.eq.s32.totalorder %s15, 0
    %p88 = por %p86, %p87
    %p89 = scmp.ne.s32.totalorder %s75, %s76
    %p90 = scmp.eq.s32.totalorder %s16, 1
    %p91 = por %p89, %p90
    %p93 = scmp.ne.s32.totalorder %s76, %s92
    %p94 = scmp.eq.s32.totalorder %s16, 0
    %p95 = por %p93, %p94
    %s96 = ssub.s32 %s10, %s17
    %p97 = scmp.eq.s32.totalorder %s96, 0
    %s99 = sadd.s32 %s98, 1
    %s100 = scalar_select %p97, %s98, %s99
    %p103 = pneg %p97
    %p104 = scmp.eq.s32.totalorder %s10, 1
    %p105 = por %p103, %p104
    %p106 = scmp.ne.s32.totalorder %s98, %s101
    %p107 = scmp.eq.s32.totalorder %s10, 0
    %p108 = por %p106, %p107
    %p109 = scmp.ne.s32.totalorder %s98, %s101
    %p110 = scmp.eq.s32.totalorder %s15, 1
    %p111 = por %p109, %p110
    %p112 = scmp.ne.s32.totalorder %s101, %s102
    %p113 = scmp.eq.s32.totalorder %s15, 0
    %p114 = por %p112, %p113
    %p115 = scmp.ne.s32.totalorder %s101, %s102
    %p116 = scmp.eq.s32.totalorder %s16, 1
    %p117 = por %p115, %p116
    %p119 = scmp.ne.s32.totalorder %s102, %s118
    %p120 = scmp.eq.s32.totalorder %s16, 0
    %p121 = por %p119, %p120
    %p122 = scmp.le.s32.totalorder 1, %s10
    %p123 = scmp.lt.s32.totalorder %s10, 3
    %p124 = pnand %p122, %p123
    %p125 = pneg %p124
    // Predicated region
    $region9: #{complex_selu.1} parent=5 // pred_check
      _
    $region10: #{complex_selu.1} parent=5 // pred_check_branch
      %127 = sbr.rel (%p124) target = $region12
    $region11: #{complex_selu.1} parent=5 // pred_region
      %s128 = ssub.s32 %s10, 1
    $region12: #{complex_selu.1} parent=5 // pred_fallthru
      _
    %p129 = scmp.lt.s32.totalorder %s10, 2
    // Predicated region
    $region13: #{complex_selu.1} parent=5 // pred_check
      %p130 = pneg %p129
    $region14: #{complex_selu.1} parent=5 // pred_check_branch
      %132 = sbr.rel (%p130) target = $region16
    $region15: #{complex_selu.1} parent=5 // pred_region
      // Predicated region
      $region17: #{complex_selu.1} parent=15 // pred_check
        %p133 = pneg %p30
      $region18: #{complex_selu.1} parent=15 // pred_check_branch
        %135 = sbr.rel (%p133) target = $region20
      $region19: #{complex_selu.1} parent=15 // pred_region
        %p136 = scmp.lt.s32.totalorder %s10, 1
        %s137 = scalar_select %p136, %s10, 1
        %s138 = smul.addr %s137, 8
        %s139 = scalar_lea.vmem %s0, %s138
      $region20: #{complex_selu.1} parent=15 // pred_fallthru
        _
      // Predicated region
      $region21: #{complex_selu.1} parent=15 // pred_check
        %p140 = pneg %p56
      $region22: #{complex_selu.1} parent=15 // pred_check_branch
        %142 = sbr.rel (%p140) target = $region24
      $region23: #{complex_selu.1} parent=15 // pred_region
        %p143 = scmp.lt.s32.totalorder %s10, 1
        %s144 = scalar_select %p143, %s10, 1
        %s145 = smul.addr %s144, 8
        %s146 = scalar_lea.vmem %s1, %s145
      $region24: #{complex_selu.1} parent=15 // pred_fallthru
        _
    $region16: #{complex_selu.1} parent=5 // pred_fallthru
      _
    %p147 = scmp.le.s32.totalorder 1, %s10
    %p148 = scmp.lt.s32.totalorder %s10, 3
    %p149 = pnand %p147, %p148
    %p150 = pneg %p149
    // Predicated region
    $region25: #{complex_selu.1} parent=5 // pred_check
      _
    $region26: #{complex_selu.1} parent=5 // pred_check_branch
      %152 = sbr.rel (%p149) target = $region28
    $region27: #{complex_selu.1} parent=5 // pred_region
      %s153 = ssub.s32 %s10, 1
      %p154 = scmp.lt.s32.totalorder %s15, 1
      %s155 = scalar_select %p154, %s15, 1
      %s156 = smul.addr %s155, 8
      %s157 = scalar_lea.vmem %s0, %s156
      %p158 = pneg %p36
      %p159 = pneg %p33
      %p160 = scmp.lt.s32.totalorder %s15, 1
      %s161 = scalar_select %p160, %s15, 1
      %s162 = smul.addr %s161, 8
      %s163 = scalar_lea.vmem %s1, %s162
      %p164 = pneg %p62
      %p165 = pneg %p59
      %p166 = pneg %p88
      %p167 = pneg %p85
      %p168 = scmp.lt.s32.totalorder %s15, 1
      %s169 = scalar_select %p168, %s15, 1
      %s170 = smul.addr %s169, 8
      %s171 = scalar_lea.vmem %s2, %s170
      %p172 = pneg %p114
      %p173 = pneg %p111
      %p174 = scmp.lt.s32.totalorder %s15, 1
      %s175 = scalar_select %p174, %s15, 1
      %s176 = smul.addr %s175, 8
      %s177 = scalar_lea.vmem %s3, %s176
      %p178 = scmp.lt.s32.totalorder %s15, 1
      %s179 = scalar_select %p178, %s15, 1
      %s180 = smul.addr %s179, 8
      %s181 = scalar_lea.vmem %s0, %s180
      %p182 = scmp.lt.s32.totalorder %s15, 1
      %s183 = scalar_select %p182, %s15, 1
      %s184 = smul.addr %s183, 8
      %s185 = scalar_lea.vmem %s1, %s184
      %p186 = scmp.lt.s32.totalorder %s15, 1
      %s187 = scalar_select %p186, %s15, 1
      %s188 = smul.addr %s187, 8
      %s189 = scalar_lea.vmem %s2, %s188
      %p190 = scmp.lt.s32.totalorder %s15, 1
      %s191 = scalar_select %p190, %s15, 1
      %s192 = smul.addr %s191, 8
      %s193 = scalar_lea.vmem %s3, %s192
      %v194 = vld [vmem:[%s181] sm:$0xff]
      %v195 = vmin.f32 %v194, 0.0
      %v196 = vmul.f32 %v195, 1.442695
      %v197 = vpow.pop %v196
      %vm198 = vcmp.gt.f32.partialorder %v194, 0.0
      %v199 = vmul.f32 %v194, 1.050701
      %v200 = vmul.f32 %v197, 1.7580993
      %v201 = vsub.f32 %v200, 1.7580993
      %v202 = vsel %vm198, %v199, %v201
      %203 = vst [vmem:[%s189] sm:$0xff] %v202
      %v204 = vld [vmem:[%s185] sm:$0xff]
      %v205 = vmin.f32 %v204, 0.0
      %v206 = vmul.f32 %v205, 1.442695
      %v207 = vpow.pop %v206
      %vm208 = vcmp.gt.f32.partialorder %v204, 0.0
      %v209 = vmul.f32 %v204, 1.050701
      %v210 = vmul.f32 %v207, 1.7580993
      %v211 = vsub.f32 %v210, 1.7580993
      %v212 = vsel %vm208, %v209, %v211
      %213 = vst [vmem:[%s193] sm:$0xff] %v212
      %p214 = scmp.lt.s32.totalorder %s15, 1
      %s215 = scalar_select %p214, %s15, 1
      %s216 = smul.addr %s215, 8
      %s217 = scalar_lea.vmem %s2, %s216
      %p218 = scmp.lt.s32.totalorder %s15, 1
      %s219 = scalar_select %p218, %s15, 1
      %s220 = smul.addr %s219, 8
      %s221 = scalar_lea.vmem %s3, %s220
      // Predicated region
      $region29: #{complex_selu.1} parent=27 // pred_check
        %p222 = pneg %p85
      $region30: #{complex_selu.1} parent=27 // pred_check_branch
        %224 = sbr.rel (%p222) target = $region32
      $region31: #{complex_selu.1} parent=27 // pred_region
        _
      $region32: #{complex_selu.1} parent=27 // pred_fallthru
        _
      // Predicated region
      $region33: #{complex_selu.1} parent=27 // pred_check
        %p225 = pneg %p111
      $region34: #{complex_selu.1} parent=27 // pred_check_branch
        %227 = sbr.rel (%p225) target = $region36
      $region35: #{complex_selu.1} parent=27 // pred_region
        _
      $region36: #{complex_selu.1} parent=27 // pred_fallthru
        _
    $region28: #{complex_selu.1} parent=5 // pred_fallthru
      _
    %p228 = scmp.le.s32.totalorder 2, %s10
    // Predicated region
    $region37: #{complex_selu.1} parent=5 // pred_check
      %p229 = pneg %p228
    $region38: #{complex_selu.1} parent=5 // pred_check_branch
      %231 = sbr.rel (%p229) target = $region40
    $region39: #{complex_selu.1} parent=5 // pred_region
      %s232 = ssub.s32 %s10, 2
      // Predicated region
      $region41: #{complex_selu.1} parent=39 // pred_check
        %p233 = pneg %p91
      $region42: #{complex_selu.1} parent=39 // pred_check_branch
        %235 = sbr.rel (%p233) target = $region44
      $region43: #{complex_selu.1} parent=39 // pred_region
        %p236 = scmp.lt.s32.totalorder %s16, 1
        %s237 = scalar_select %p236, %s16, 1
        %s238 = smul.addr %s237, 8
        %s239 = scalar_lea.vmem %s2, %s238
      $region44: #{complex_selu.1} parent=39 // pred_fallthru
        _
      // Predicated region
      $region45: #{complex_selu.1} parent=39 // pred_check
        %p240 = pneg %p117
      $region46: #{complex_selu.1} parent=39 // pred_check_branch
        %242 = sbr.rel (%p240) target = $region48
      $region47: #{complex_selu.1} parent=39 // pred_region
        %p243 = scmp.lt.s32.totalorder %s16, 1
        %s244 = scalar_select %p243, %s16, 1
        %s245 = smul.addr %s244, 8
        %s246 = scalar_lea.vmem %s3, %s245
      $region48: #{complex_selu.1} parent=39 // pred_fallthru
        _
    $region40: #{complex_selu.1} parent=5 // pred_fallthru
      _
  $region6: #{complex_selu.1} parent=0 // loop_footer
    %s14 = sadd.s32 1, %s10
  $region7: #{complex_selu.1} parent=0 // loop_footer_branch
    %9 = sbr.rel target = $region3
  $region8: #{complex_selu.1} parent=0 // loop_exit
    _

</llo_original>
